<compile_context>
chip_gen: v7x
topology: tpu7x:2x2x1
jax: 0.10.0
libtpu: 0.0.40
codegen_flags: <defaults>
</compile_context>

<pallas_src>
import math

import jax
import jax.numpy as jnp
from jax.experimental import pallas as pl
from jax.experimental.pallas import tpu as pltpu


def _round_up(n: int, m: int) -> int:
    return ((n + m - 1) // m) * m


def _sublane_pack(dtype) -> int:
    """Native sublane packing factor: 8 rows for 4-byte, 16 for 2-byte, 32 for 1-byte."""
    return max(8, 32 // jnp.dtype(dtype).itemsize)


def make_pe_table(d_model: int, max_seq_length: int) -> jnp.ndarray:
    """(1, max_S, D) float32 table, identical to the PyTorch __init__ math."""
    position = jnp.arange(max_seq_length, dtype=jnp.float32)[:, None]       # (S, 1)
    div_term = jnp.exp(
        jnp.arange(0, d_model, 2, dtype=jnp.float32)
        * -(math.log(10000.0) / d_model)
    )                                                                        # (D/2,)
    angles = position * div_term                                             # (S, D/2)
    # Interleave sin/cos -> pe[:, 0::2] = sin, pe[:, 1::2] = cos
    pe = jnp.stack([jnp.sin(angles), jnp.cos(angles)], axis=-1)              # (S, D/2, 2)
    pe = pe.reshape(max_seq_length, d_model)                                 # (S, D)
    return pe[None, :, :]                                                    # (1, S, D)


def pack_pe(pe: jnp.ndarray, dtype) -> jnp.ndarray:
    """Cast pe to the model dtype and pack it into a lane-dense (1, rows, 128)
    layout.  Done ONCE at init so the per-call path has no cast / reshape HBM
    traffic over the pe buffer."""
    _, max_s, d = pe.shape
    flat = max_s * d
    flat_pad = _round_up(flat, 128)
    p = pe.astype(dtype).reshape(flat)
    if flat_pad != flat:
        p = jnp.pad(p, (0, flat_pad - flat))
    return p.reshape(1, flat_pad // 128, 128)


def _pe_add_kernel(x_ref, pe_ref, o_ref):
    # Pure HBM-bound elementwise add.  pe_ref has a leading extent of 1 and
    # broadcasts over the batch axis when x_ref carries the full batch (the
    # small-input path); in the tiled path both are (1, TS, 128).
    o_ref[...] = x_ref[...] + pe_ref[...]


def positional_encoding_forward(
    x: jnp.ndarray,
    pe_packed: jnp.ndarray,
    max_seq_length: int,
    d_model: int,
    *,
    tile_bytes: int = 4 * 1024 * 1024,      # ~4 MiB blocks -> ~24 MiB live (x/pe/out dbl-buffered)
    small_bytes: int = 1 * 1024 * 1024,     # below this: single-block fast path, grid=()
    vmem_limit_bytes: int = 48 * 1024 * 1024,  # headroom under v7x's 64 MiB physical VMEM
    alias_input: bool = False,              # set True only if the caller donates x
) -> jnp.ndarray:
    """x: (B, S, D); pe_packed: (1, pe_rows, 128) from pack_pe(). Returns x + pe[:, :S]."""
    B, S, D = x.shape
    if D != d_model:
        raise ValueError(f"d_model mismatch: x has {D}, module has {d_model}")
    if S > max_seq_length:
        raise ValueError(f"seq_len {S} exceeds max_seq_length {max_seq_length}")
    if pe_packed.dtype != x.dtype:
        raise ValueError(f"pe dtype {pe_packed.dtype} != x dtype {x.dtype}; "
                         "build PositionalEncoding with the model dtype")

    dtype = x.dtype
    itemsize = jnp.dtype(dtype).itemsize
    pack = _sublane_pack(dtype)
    pe_rows = pe_packed.shape[1]

    flat = S * D                      # pe[:, :S] row-major == first S*D elements of pe
    flat_pad = _round_up(flat, 128)   # lane-dense padding (128 lanes)
    rows = flat_pad // 128

    # x -> (B, rows, 128).  Metadata-only when x is contiguous and flat % 128 == 0.
    x_flat = x.reshape(B, flat)
    if flat_pad != flat:
        x_flat = jnp.pad(x_flat, ((0, 0), (0, flat_pad - flat)))
    x3 = x_flat.reshape(B, rows, 128)

    # Keep x / pe / out extents identical along the tiled axis so boundary
    # blocks are handled identically for all three arrays.  No copy when
    # S == max_seq_length (or the padded row counts coincide).
    pe_used = pe_packed if pe_rows == rows else pe_packed[:, :rows, :]

    cost = pl.CostEstimate(
        flops=B * flat,
        transcendentals=0,
        bytes_accessed=(2 * B * flat + flat) * itemsize,
    )
    io_alias = {0: 0} if alias_input else {}

    total_bytes = B * flat_pad * itemsize
    if total_bytes <= small_bytes:
        # ---- small-input fast path: one whole-array block, no grid ----------
        out3 = pl.pallas_call(
            _pe_add_kernel,
            out_shape=jax.ShapeDtypeStruct((B, rows, 128), dtype),
            in_specs=[
                pl.BlockSpec((B, rows, 128), lambda: (0, 0, 0)),
                pl.BlockSpec((1, rows, 128), lambda: (0, 0, 0)),
            ],
            out_specs=pl.BlockSpec((B, rows, 128), lambda: (0, 0, 0)),
            cost_estimate=cost,
            compiler_params=pltpu.CompilerParams(vmem_limit_bytes=vmem_limit_bytes),
            input_output_aliases=io_alias,
        )(x3, pe_used)
    else:
        # ---- tiled path: grid = (num_tiles, B), tile outer / batch inner ----
        if rows >= pack:
            ts_cap = max(pack, ((tile_bytes // (128 * itemsize)) // pack) * pack)
            ts = min(ts_cap, (rows // pack) * pack)   # multiple of sublane packing
        else:
            ts = rows                                 # full-dim block (allowed)
        num_tiles = pl.cdiv(rows, ts)

        out3 = pl.pallas_call(
            _pe_add_kernel,
            out_shape=jax.ShapeDtypeStruct((B, rows, 128), dtype),
            grid_spec=pltpu.PrefetchScalarGridSpec(
                num_scalar_prefetch=0,
                grid=(num_tiles, B),   # tile OUTER, batch INNER -> pe tile reused across B
                in_specs=[
                    pl.BlockSpec((1, ts, 128), lambda t, b: (b, t, 0)),   # x
                    pl.BlockSpec((1, ts, 128), lambda t, b: (0, t, 0)),   # pe (b-independent)
                ],
                out_specs=pl.BlockSpec((1, ts, 128), lambda t, b: (b, t, 0)),
            ),
            cost_estimate=cost,
            compiler_params=pltpu.CompilerParams(
                dimension_semantics=("parallel", "parallel"),
                vmem_limit_bytes=vmem_limit_bytes,
            ),
            input_output_aliases=io_alias,
        )(x3, pe_used)

    out_flat = out3.reshape(B, flat_pad)
    if flat_pad != flat:
        out_flat = out_flat[:, :flat]
    return out_flat.reshape(B, S, D)


class PositionalEncoding:
    """JAX/Pallas equivalent of the PyTorch PositionalEncoding module."""

    def __init__(self, d_model: int, max_seq_length: int, dtype=jnp.float32):
        self.d_model = d_model
        self.max_seq_length = max_seq_length
        self.dtype = jnp.dtype(dtype)
        self.pe = make_pe_table(d_model, max_seq_length)        # (1, max_S, D) f32 reference
        self.pe_packed = pack_pe(self.pe, self.dtype)           # (1, rows, 128) model dtype

    def __call__(self, x: jnp.ndarray) -> jnp.ndarray:
        return positional_encoding_forward(
            x, self.pe_packed, self.max_seq_length, self.d_model
        )


if __name__ == "__main__":
    # Small shapes consistent with the module: batch=2, seq=8, d_model=32.
    B, S, D = 2, 8, 32
    MAX_SEQ = 16

    key = jax.random.PRNGKey(0)
    x = jax.random.normal(key, (B, S, D), dtype=jnp.float32)

    mod = PositionalEncoding(d_model=D, max_seq_length=MAX_SEQ, dtype=x.dtype)
    out = jax.block_until_ready(mod(x))                      # small-path (grid=()) kernel

    ref = x + mod.pe[:, :S, :].astype(x.dtype)
    assert out.shape == (B, S, D)
    assert jnp.allclose(out, ref, atol=1e-6, rtol=1e-6)

    # Also exercise the tiled (grid) path with a modest shape above the
    # small-input threshold: B=4, S=512, D=256 (f32, 2 MiB of activations).
    B2, S2, D2, MAX2 = 4, 512, 256, 512
    x2 = jax.random.normal(jax.random.PRNGKey(0), (B2, S2, D2), dtype=jnp.float32)
    mod2 = PositionalEncoding(d_model=D2, max_seq_length=MAX2, dtype=x2.dtype)
    out2 = jax.block_until_ready(mod2(x2))
    ref2 = x2 + mod2.pe[:, :S2, :]
    assert out2.shape == (B2, S2, D2)
    assert jnp.allclose(out2, ref2, atol=1e-6, rtol=1e-6)

    print("KERNEL_OK")
</pallas_src>

<mosaic_0001>
module attributes {stable_mosaic.version = 11 : i64} {
  func.func @_pe_add_kernel(%arg0: memref<2x2x128xf32, #tpu.memory_space<vmem>>, %arg1: memref<1x2x128xf32, #tpu.memory_space<vmem>>, %arg2: memref<2x2x128xf32, #tpu.memory_space<vmem>>) attributes {dimension_semantics = [], scalar_prefetch = 0 : i64, scratch_operands = 0 : i64, tpu.core_type = #tpu.core_type<tc>} {
    %c0 = arith.constant 0 : index
    %c0_0 = arith.constant 0 : index
    %c0_1 = arith.constant 0 : index
    %0 = vector.load %arg0[%c0, %c0_0, %c0_1] : memref<2x2x128xf32, #tpu.memory_space<vmem>>, vector<2x2x128xf32>
    %c0_2 = arith.constant 0 : index
    %c0_3 = arith.constant 0 : index
    %c0_4 = arith.constant 0 : index
    %1 = vector.load %arg1[%c0_2, %c0_3, %c0_4] : memref<1x2x128xf32, #tpu.memory_space<vmem>>, vector<1x2x128xf32>
    %2 = vector.broadcast %1 : vector<1x2x128xf32> to vector<2x2x128xf32>
    %3 = arith.addf %0, %2 : vector<2x2x128xf32>
    %c0_5 = arith.constant 0 : index
    %c0_6 = arith.constant 0 : index
    %c0_7 = arith.constant 0 : index
    %4 = vector.load %arg2[%c0_5, %c0_6, %c0_7] : memref<2x2x128xf32, #tpu.memory_space<vmem>>, vector<2x2x128xf32>
    tpu.vector_store %arg2[%c0_5, %c0_6, %c0_7], %3 {strides = array<i32>} : memref<2x2x128xf32, #tpu.memory_space<vmem>>, vector<2x2x128xf32>,
    return
  }
}

</mosaic_0001>

<llo_original>
// kernel: tpu_custom_call.1
$region0: #{tpu_custom_call.1}
  #allocation0 [shape = 'u32[]', space=smem, size = 0x4, offset = 0x4, fixed_abs, tag = 'smem constant byte address 0x4 - core index']
  #allocation1 [shape = 'u32[144,128]{1,0:T(1,128)}', space=vmem, size = 0x12000, scoped, tag = 'internal scratch']
  %s0 = inlined_call_operand.hbm [shape: f32[2,2,128], index: 0, kind: input, shape index: {}]
  %s1 = inlined_call_operand.vmem [shape: f32[1,2,128], index: 1, kind: input, shape index: {}]
  %s2 = inlined_call_operand.hbm [shape: f32[2,2,128], index: 2, kind: output, shape index: {}]
  %s3 = sld [smem:[#allocation0]]
  $region22: #{tpu_custom_call.1} parent=0
    _
  %s5 = ssub.s32 1, %s3
  %s6 = scalar_select 0, %s5, %s3
  $region1: #{tpu_custom_call.1} parent=0
    #allocation2 [shape = 'u8[2048]{0}', space=vmem, size = 0x800, scoped, tag = 'input window, operand 0, single buffered']
    #allocation3 [shape = 's32[1]{0}', space=sflag, size = 0x4, scoped, tag = 'scoped memory for tpu_custom_call.1']
    #allocation4 [shape = 's32[1]{0}', space=sflag, size = 0x4, scoped, tag = 'scoped memory for tpu_custom_call.1']
    #allocation5 [shape = 'u8[2048]{0}', space=vmem, size = 0x800, scoped, tag = 'output window, operand 0, single buffered']
    %7 = vsyncpa [#allocation3], 0
    %8 = vsyncpa [#allocation4], 0
    // Predicated region
    $region2: #{tpu_custom_call.1} parent=1 // pred_check
      _
    $region3: #{tpu_custom_call.1} parent=1 // pred_check_branch
      %10 = sbr.rel (0) target = $region5
    $region4: #{tpu_custom_call.1} parent=1 // pred_region
      %s12 = ssub.s32 64, 64
      %13 = vsyncadd [#allocation3], %s12
      %s14 = sshll.u32 [#allocation2], 4
      %s15 = int_to_ptr.vmem [resolvable:$true] %s14
      %20 = dma.hbm_to_vmem [thread:$0]  %s0, 64, %s15, [#allocation3], 32, 32, 2
    $region5: #{tpu_custom_call.1} parent=1 // pred_fallthru
      _
    // Predicated region
    $region6: #{tpu_custom_call.1} parent=1 // pred_check
      _
    $region7: #{tpu_custom_call.1} parent=1 // pred_check_branch
      %22 = sbr.rel (0) target = $region9
    $region8: #{tpu_custom_call.1} parent=1 // pred_region
      _
    $region9: #{tpu_custom_call.1} parent=1 // pred_fallthru
      _
    // Predicated region
    $region10: #{tpu_custom_call.1} parent=1 // pred_check
      _
    $region11: #{tpu_custom_call.1} parent=1 // pred_check_branch
      %24 = sbr.rel (0) target = $region13
    $region12: #{tpu_custom_call.1} parent=1 // pred_region
      %25 = dma.done [#allocation3], 64
    $region13: #{tpu_custom_call.1} parent=1 // pred_fallthru
      _
    %v26 = vld [vmem:[#allocation2] sm:$0x3]
    %v27 = vld [vmem:[#allocation2 + $0x2] sm:$0x3]
    %v28 = vld [vmem:[%s1] sm:$0x3]
    %v29 = vadd.f32 %v26, %v28
    %v30 = vadd.f32 %v27, %v28
    %31 = vst [vmem:[#allocation5] sm:$0x3] %v29
    %32 = vst [vmem:[#allocation5 + $0x2] sm:$0x3] %v30
    // Predicated region
    $region14: #{tpu_custom_call.1} parent=1 // pred_check
      _
    $region15: #{tpu_custom_call.1} parent=1 // pred_check_branch
      %34 = sbr.rel (0) target = $region17
    $region16: #{tpu_custom_call.1} parent=1 // pred_region
      %s36 = ssub.s32 64, 64
      %37 = vsyncadd [#allocation4], %s36
      %s38 = sshll.u32 [#allocation5], 4
      %s39 = int_to_ptr.vmem [resolvable:$true] %s38
      %44 = dma.vmem_to_hbm [thread:$0]  %s39, 64, %s2, [#allocation4], 32, 32, 2
    $region17: #{tpu_custom_call.1} parent=1 // pred_fallthru
      _
    // Predicated region
    $region18: #{tpu_custom_call.1} parent=1 // pred_check
      _
    $region19: #{tpu_custom_call.1} parent=1 // pred_check_branch
      %46 = sbr.rel (0) target = $region21
    $region20: #{tpu_custom_call.1} parent=1 // pred_region
      %47 = dma.done [#allocation4], 64
    $region21: #{tpu_custom_call.1} parent=1 // pred_fallthru
      _
    %48 = vsyncpa [#allocation3], 1
    %49 = vsyncpa [#allocation4], 1

</llo_original>
